<compile_context>
chip_gen: v5e
topology: v5e:2x2
jax: 0.10.0
libtpu: 0.0.40
codegen_flags: <defaults>
</compile_context>

<pallas_src>
import jax
import jax.numpy as jnp
from jax.experimental import pallas as pl
from jax.experimental.pallas import tpu as pltpu


def _round_up(x, m):
    return (x + m - 1) // m * m


def _vmem_limit_bytes():
    # Generation-aware scoped-VMEM limit: ~half of physical VMEM, clamped to
    # [32 MiB, 64 MiB].  v5e/v6e (128 MiB phys) -> 64 MiB, v7x (64 MiB phys)
    # -> 32 MiB.  Falls back to 32 MiB if the query is unavailable.
    try:
        cap = pltpu.get_tpu_info().vmem_capacity_bytes
        return int(min(64 * 1024 * 1024, max(32 * 1024 * 1024, cap // 2)))
    except Exception:
        return 32 * 1024 * 1024


def _resident_spec(block_shape, single_buffer):
    # Weight / bias blocks use a constant index_map so they stay resident in
    # VMEM across grid steps; single-buffering them reclaims VMEM headroom
    # (most valuable on v7x, where VMEM is the scarce resource).
    ndim = len(block_shape)
    index_map = lambda *_: (0,) * ndim
    if single_buffer:
        try:
            return pl.BlockSpec(block_shape, index_map,
                                pipeline_mode=pl.Buffered(1))
        except TypeError:
            pass
    return pl.BlockSpec(block_shape, index_map)


# ----------------------------- kernels -------------------------------------


def _nlinear_rows_kernel(x_ref, w_ref, b_ref, o_ref):
    # x_ref: [TM, L]; w_ref: [L, Pp] (folded, zero-padded cols); b_ref: [1, Pp] f32.
    y = jnp.dot(x_ref[...], w_ref[...], preferred_element_type=jnp.float32)
    o_ref[...] = (y + b_ref[...]).astype(o_ref.dtype)


def _nlinear_chan_kernel(x_ref, w_ref, b_ref, o_ref):
    # x_ref: [L, TC] (batch dim squeezed); w_ref: [P, L] folded; b_ref: [P, 1] f32.
    y = jnp.dot(w_ref[...], x_ref[...], preferred_element_type=jnp.float32)
    o_ref[...] = (y + b_ref[...]).astype(o_ref.dtype)


# ----------------------------- tile sizing ----------------------------------


def _pick_tm(M, L, Pp, itemsize, vmem_limit):
    # Per-step traffic: double-buffered x tile [TM, L] + out tile [TM, Pp];
    # resident weight [L, Pp] + bias sit on top.  Leave ~25% headroom.
    weight_bytes = (L * Pp + Pp) * itemsize
    budget = max(int(vmem_limit * 0.75) - weight_bytes, 8 * (L + Pp) * itemsize)
    per_row = 2 * (L + Pp) * itemsize
    tm = max(8, min(2048, budget // max(per_row, 1)))
    tm = (tm // 8) * 8
    # Keep >= ~8 grid steps: enables DMA/compute overlap and megacore sharding
    # across both v7x TensorCores (dimension_semantics=("parallel",)).
    tm = min(tm, _round_up(pl.cdiv(M, 8), 8))
    tm = min(tm, _round_up(M, 8))
    return max(8, int(tm))


def _pick_tc(B, C, L, P, itemsize, vmem_limit):
    # Channel-tile width (multiple of 128) from the VMEM budget, then shrunk
    # (down to 128) until the grid has >= ~8 steps for pipelining / megacore.
    weight_bytes = (P * L + P) * itemsize
    budget = max(int(vmem_limit * 0.75) - weight_bytes, 128 * (L + P) * itemsize)
    per_col = 2 * (L + P) * itemsize
    tc = max(128, min(1024, budget // max(per_col, 1)))
    tc = (tc // 128) * 128
    tc = min(tc, _round_up(C, 128))
    while tc > 128 and B * pl.cdiv(C, tc) < 8:
        tc = max(128, (tc // 2) // 128 * 128)
    return int(tc)


# ----------------------------- wrappers ------------------------------------


def _forward_rows(x, w_fold_t, b_row, P, w_dtype, vmem_limit):
    # x: [B, L, C] (small C); w_fold_t: [L, P] folded (f32); b_row: [1, P] f32.
    B, L, C = x.shape
    M = B * C
    Pp = _round_up(P, 128)
    dtype = x.dtype
    itemsize = jnp.dtype(dtype).itemsize

    # Zero-pad pred_len to a lane-dense multiple of 128.  NOTE: the final
    # slice relies on the padded weight AND bias columns being exactly zero;
    # keep them zero if an epilogue (e.g. activation) is ever added.
    w_p = jnp.pad(w_fold_t.astype(w_dtype), ((0, 0), (0, Pp - P)))
    b_p = jnp.pad(b_row, ((0, 0), (0, Pp - P)))            # stays f32

    # [B, L, C] -> [B, C, L] -> [M, L].  These transposes (and the inverse on
    # the output) are the remaining extra HBM pass; this path is only taken
    # for C < 64 where the tensors are tiny, since the module's contract
    # requires a [B, P, C] result layout.
    x2 = jnp.transpose(x, (0, 2, 1)).reshape(M, L)

    TM = _pick_tm(M, L, Pp, itemsize, vmem_limit)
    grid = (pl.cdiv(M, TM),)

    def call(single_buffer_consts):
        return pl.pallas_call(
            _nlinear_rows_kernel,
            out_shape=jax.ShapeDtypeStruct((M, Pp), dtype),
            grid_spec=pltpu.PrefetchScalarGridSpec(
                num_scalar_prefetch=0,
                grid=grid,
                in_specs=[
                    pl.BlockSpec((TM, L), lambda i: (i, 0)),
                    _resident_spec((L, Pp), single_buffer_consts),   # weight
                    _resident_spec((1, Pp), single_buffer_consts),   # bias
                ],
                out_specs=pl.BlockSpec((TM, Pp), lambda i: (i, 0)),
            ),
            compiler_params=pltpu.CompilerParams(
                dimension_semantics=("parallel",),
                vmem_limit_bytes=vmem_limit,
            ),
            cost_estimate=pl.CostEstimate(
                flops=2 * M * L * Pp,
                transcendentals=0,
                bytes_accessed=itemsize * (M * L + L * Pp + M * Pp) + 4 * Pp,
            ),
        )(x2, w_p, b_p)

    try:
        out2 = call(True)
    except Exception:
        out2 = call(False)

    # [M, Pp] -> [M, P] -> [B, C, P] -> [B, P, C]
    return jnp.transpose(out2[:, :P].reshape(B, C, P), (0, 2, 1))


def _forward_channels(x, w_fold, b_col, w_dtype, vmem_limit):
    # x: [B, L, C]; w_fold: [P, L] folded (f32); b_col: [P, 1] f32.
    B, L, C = x.shape
    P = w_fold.shape[0]
    dtype = x.dtype
    itemsize = jnp.dtype(dtype).itemsize

    w_k = w_fold.astype(w_dtype)

    if C < 128:
        TC = C                       # full channel dim (satisfies the tiling rule)
    else:
        TC = _pick_tc(B, C, L, P, itemsize, vmem_limit)
    grid = (B, pl.cdiv(C, TC))

    def call(single_buffer_consts):
        return pl.pallas_call(
            _nlinear_chan_kernel,
            out_shape=jax.ShapeDtypeStruct((B, P, C), dtype),
            grid_spec=pltpu.PrefetchScalarGridSpec(
                num_scalar_prefetch=0,
                grid=grid,
                in_specs=[
                    pl.BlockSpec((None, L, TC), lambda b, c: (b, 0, c)),
                    _resident_spec((P, L), single_buffer_consts),    # weight
                    _resident_spec((P, 1), single_buffer_consts),    # bias
                ],
                out_specs=pl.BlockSpec((None, P, TC), lambda b, c: (b, 0, c)),
            ),
            compiler_params=pltpu.CompilerParams(
                dimension_semantics=("parallel", "parallel"),
                vmem_limit_bytes=vmem_limit,
            ),
            cost_estimate=pl.CostEstimate(
                flops=2 * B * P * L * C,
                transcendentals=0,
                bytes_accessed=itemsize * (B * L * C + P * L + B * P * C) + 4 * P,
            ),
        )(x, w_k, b_col)

    try:
        return call(True)
    except Exception:
        return call(False)


def nlinear_forward(x, weight, bias, *, weight_dtype=None):
    """NLinear forward.  x: [B, seq_len, C], weight: [pred_len, seq_len],
    bias: [pred_len].  Returns [B, pred_len, C] (matches the PyTorch module)."""
    B, L, C = x.shape
    P = weight.shape[0]

    # Fold the last-timestep normalization into the weight (computed in f32):
    #   (x - x_last) @ W.T + b + x_last == x @ W''.T + b.
    w32 = weight.astype(jnp.float32)                    # [P, L]
    corr = 1.0 - jnp.sum(w32, axis=1, keepdims=True)    # [P, 1]
    w_fold = w32.at[:, -1:].add(corr)                   # [P, L]
    b32 = bias.astype(jnp.float32)                      # bias stays f32 end-to-end

    # Matmul dtype for the folded weight.  NOTE: for bf16 activations the
    # folded last column is O(1) while the raw weights are small; pass
    # weight_dtype=jnp.float32 if bf16 accuracy regresses.
    w_dtype = x.dtype if weight_dtype is None else jnp.dtype(weight_dtype)

    vmem_limit = _vmem_limit_bytes()

    if C >= 64:
        # Channel-dense path: no wrapper transposes, no pred_len padding,
        # result written directly as [B, P, C].
        return _forward_channels(x, w_fold, b32.reshape(P, 1), w_dtype, vmem_limit)
    # Small channel count: lane-dense [B*C, L] row layout (data is tiny here).
    return _forward_rows(x, jnp.transpose(w_fold), b32.reshape(1, P), P,
                         w_dtype, vmem_limit)


def nlinear_reference(x, weight, bias):
    seq_last = x[:, -1:, :]
    y = jnp.einsum('blc,pl->bpc', x - seq_last, weight) + bias[None, :, None]
    return y + seq_last


if __name__ == "__main__":
    key = jax.random.PRNGKey(0)

    def make_case(key, B, L, C, P):
        kx, kw, kb, key = jax.random.split(key, 4)
        x = jax.random.normal(kx, (B, L, C), dtype=jnp.float32)
        bound = 1.0 / (L ** 0.5)
        w = jax.random.uniform(kw, (P, L), minval=-bound, maxval=bound,
                               dtype=jnp.float32)
        b = jax.random.uniform(kb, (P,), minval=-bound, maxval=bound,
                               dtype=jnp.float32)
        return key, x, w, b

    # --- rows path (small channel count): B=2, seq_len=8, C=4, pred_len=6 ---
    key, x, w, b = make_case(key, 2, 8, 4, 6)
    out = jax.block_until_ready(nlinear_forward(x, w, b))
    ref = nlinear_reference(x, w, b)
    assert out.shape == (2, 6, 4)
    assert jnp.allclose(out, ref, atol=1e-4, rtol=1e-4), \
        float(jnp.max(jnp.abs(out - ref)))

    # --- channels path at the lowered threshold (C=64) ---
    key, x, w, b = make_case(key, 2, 16, 64, 8)
    out = jax.block_until_ready(nlinear_forward(x, w, b))
    ref = nlinear_reference(x, w, b)
    assert out.shape == (2, 8, 64)
    assert jnp.allclose(out, ref, atol=1e-4, rtol=1e-4), \
        float(jnp.max(jnp.abs(out - ref)))

    # --- channels path, lane-full tile (C=128) ---
    key, x, w, b = make_case(key, 2, 16, 128, 8)
    out = jax.block_until_ready(nlinear_forward(x, w, b))
    ref = nlinear_reference(x, w, b)
    assert out.shape == (2, 8, 128)
    assert jnp.allclose(out, ref, atol=1e-4, rtol=1e-4), \
        float(jnp.max(jnp.abs(out - ref)))

    print("KERNEL_OK")
</pallas_src>

<mosaic_0001>
module attributes {stable_mosaic.version = 11 : i64} {
  func.func @_nlinear_rows_kernel(%arg0: i32, %arg1: memref<8x8xf32, #tpu.memory_space<vmem>>, %arg2: memref<8x128xf32, #tpu.memory_space<vmem>>, %arg3: memref<1x128xf32, #tpu.memory_space<vmem>>, %arg4: memref<8x128xf32, #tpu.memory_space<vmem>>) attributes {dimension_semantics = [#tpu.dimension_semantics<parallel>], iteration_bounds = array<i64: 1>, scalar_prefetch = 0 : i64, scratch_operands = 0 : i64, tpu.core_type = #tpu.core_type<tc>, window_params = [{transform_indices = @transform_0, window_bounds = array<i64: 8, 8>}, {pipeline_mode = #tpu.pipeline_mode<synchronous>, transform_indices = @transform_1, window_bounds = array<i64: 8, 128>}, {pipeline_mode = #tpu.pipeline_mode<synchronous>, transform_indices = @transform_2, window_bounds = array<i64: 1, 128>}, {transform_indices = @transform_3, window_bounds = array<i64: 8, 128>}]} {
    %c0 = arith.constant 0 : index
    %c0_0 = arith.constant 0 : index
    %0 = vector.load %arg1[%c0, %c0_0] : memref<8x8xf32, #tpu.memory_space<vmem>>, vector<8x8xf32>
    %c0_1 = arith.constant 0 : index
    %c0_2 = arith.constant 0 : index
    %1 = vector.load %arg2[%c0_1, %c0_2] : memref<8x128xf32, #tpu.memory_space<vmem>>, vector<8x128xf32>
    %cst = arith.constant dense<0.000000e+00> : vector<8x128xf32>
    %2 = tpu.matmul %0, %1, %cst {dimension_numbers = #tpu.dot_dimension_numbers<[1], [0], [0], [1], [0, 0, 1, 1], [], []>} : vector<8x8xf32>, vector<8x128xf32>, vector<8x128xf32> -> vector<8x128xf32>
    %c0_3 = arith.constant 0 : index
    %c0_4 = arith.constant 0 : index
    %3 = vector.load %arg3[%c0_3, %c0_4] : memref<1x128xf32, #tpu.memory_space<vmem>>, vector<1x128xf32>
    %4 = vector.broadcast %3 : vector<1x128xf32> to vector<8x128xf32>
    %5 = arith.addf %2, %4 : vector<8x128xf32>
    %c0_5 = arith.constant 0 : index
    %c0_6 = arith.constant 0 : index
    %6 = vector.load %arg4[%c0_5, %c0_6] : memref<8x128xf32, #tpu.memory_space<vmem>>, vector<8x128xf32>
    tpu.vector_store %arg4[%c0_5, %c0_6], %5 {strides = array<i32>} : memref<8x128xf32, #tpu.memory_space<vmem>>, vector<8x128xf32>,
    return
  }
  func.func @transform_0(%arg0: i32) -> (i32, i32) {
    %c0_i32 = arith.constant 0 : i32
    %c0_i32_0 = arith.constant 0 : i32
    return %arg0, %c0_i32 : i32, i32
  }
  func.func @transform_1(%arg0: i32) -> (i32, i32) {
    %c0_i32 = arith.constant 0 : i32
    %c0_i32_0 = arith.constant 0 : i32
    %c0_i32_1 = arith.constant 0 : i32
    return %c0_i32, %c0_i32_0 : i32, i32
  }
  func.func @transform_2(%arg0: i32) -> (i32, i32) {
    %c0_i32 = arith.constant 0 : i32
    %c0_i32_0 = arith.constant 0 : i32
    %c0_i32_1 = arith.constant 0 : i32
    return %c0_i32, %c0_i32_0 : i32, i32
  }
  func.func @transform_3(%arg0: i32) -> (i32, i32) {
    %c0_i32 = arith.constant 0 : i32
    %c0_i32_0 = arith.constant 0 : i32
    return %arg0, %c0_i32 : i32, i32
  }
}

module attributes {stable_mosaic.version = 11 : i64} {
  func.func @_nlinear_rows_kernel(%arg0: i32, %arg1: memref<8x8xf32, #tpu.memory_space<vmem>>, %arg2: memref<8x128xf32, #tpu.memory_space<vmem>>, %arg3: memref<1x128xf32, #tpu.memory_space<vmem>>, %arg4: memref<8x128xf32, #tpu.memory_space<vmem>>) attributes {dimension_semantics = [#tpu.dimension_semantics<parallel>], iteration_bounds = array<i64: 1>, scalar_prefetch = 0 : i64, scratch_operands = 0 : i64, tpu.core_type = #tpu.core_type<tc>, window_params = [{transform_indices = @transform_0, window_bounds = array<i64: 8, 8>}, {pipeline_mode = #tpu.pipeline_mode<synchronous>, transform_indices = @transform_1, window_bounds = array<i64: 8, 128>}, {pipeline_mode = #tpu.pipeline_mode<synchronous>, transform_indices = @transform_2, window_bounds = array<i64: 1, 128>}, {transform_indices = @transform_3, window_bounds = array<i64: 8, 128>}]} {
    %c0 = arith.constant 0 : index
    %c0_0 = arith.constant 0 : index
    %0 = vector.load %arg1[%c0, %c0_0] : memref<8x8xf32, #tpu.memory_space<vmem>>, vector<8x8xf32>
    %c0_1 = arith.constant 0 : index
    %c0_2 = arith.constant 0 : index
    %1 = vector.load %arg2[%c0_1, %c0_2] : memref<8x128xf32, #tpu.memory_space<vmem>>, vector<8x128xf32>
    %cst = arith.constant dense<0.000000e+00> : vector<8x128xf32>
    %2 = tpu.matmul %0, %1, %cst {dimension_numbers = #tpu.dot_dimension_numbers<[1], [0], [0], [1], [0, 0, 1, 1], [], []>} : vector<8x8xf32>, vector<8x128xf32>, vector<8x128xf32> -> vector<8x128xf32>
    %c0_3 = arith.constant 0 : index
    %c0_4 = arith.constant 0 : index
    %3 = vector.load %arg3[%c0_3, %c0_4] : memref<1x128xf32, #tpu.memory_space<vmem>>, vector<1x128xf32>
    %4 = vector.broadcast %3 : vector<1x128xf32> to vector<8x128xf32>
    %5 = arith.addf %2, %4 : vector<8x128xf32>
    %c0_5 = arith.constant 0 : index
    %c0_6 = arith.constant 0 : index
    %6 = vector.load %arg4[%c0_5, %c0_6] : memref<8x128xf32, #tpu.memory_space<vmem>>, vector<8x128xf32>
    tpu.vector_store %arg4[%c0_5, %c0_6], %5 {strides = array<i32>} : memref<8x128xf32, #tpu.memory_space<vmem>>, vector<8x128xf32>,
    return
  }
  func.func @transform_0(%arg0: i32) -> (i32, i32) {
    %c0_i32 = arith.constant 0 : i32
    %c0_i32_0 = arith.constant 0 : i32
    return %arg0, %c0_i32 : i32, i32
  }
  func.func @transform_1(%arg0: i32) -> (i32, i32) {
    %c0_i32 = arith.constant 0 : i32
    %c0_i32_0 = arith.constant 0 : i32
    %c0_i32_1 = arith.constant 0 : i32
    return %c0_i32, %c0_i32_0 : i32, i32
  }
  func.func @transform_2(%arg0: i32) -> (i32, i32) {
    %c0_i32 = arith.constant 0 : i32
    %c0_i32_0 = arith.constant 0 : i32
    %c0_i32_1 = arith.constant 0 : i32
    return %c0_i32, %c0_i32_0 : i32, i32
  }
  func.func @transform_3(%arg0: i32) -> (i32, i32) {
    %c0_i32 = arith.constant 0 : i32
    %c0_i32_0 = arith.constant 0 : i32
    return %arg0, %c0_i32 : i32, i32
  }
}

</mosaic_0001>

<llo_original>
// kernel: tpu_custom_call.1
$region0: #{tpu_custom_call.1}
  #allocation0 [shape = 'u32[]', space=smem, size = 0x4, offset = 0x4, fixed_abs, tag = 'smem constant byte address 0x4 - core index']
  #allocation1 [shape = 'u32[72,128]{1,0:T(1,128)}', space=vmem, size = 0x9000, scoped, tag = 'internal scratch']
  %s0 = inlined_call_operand.hbm [shape: f32[8,8], index: 0, kind: input, shape index: {}]
  %s1 = inlined_call_operand.hbm [shape: f32[8,128], index: 1, kind: input, shape index: {}]
  %s2 = inlined_call_operand.vmem [shape: f32[1,128], index: 2, kind: input, shape index: {}]
  %s3 = inlined_call_operand.hbm [shape: f32[8,128], index: 3, kind: output, shape index: {}]
  %s4 = sld [smem:[#allocation0]]
  $region30: #{tpu_custom_call.1} parent=0
    _
  %s6 = ssub.s32 1, %s4
  %s7 = scalar_select 0, %s6, %s4
  $region1: #{tpu_custom_call.1} parent=0
    #allocation2 [shape = 'u8[4096]{0}', space=vmem, size = 0x1000, scoped, tag = 'input window, operand 0, single buffered']
    #allocation3 [shape = 's32[1]{0}', space=sflag, size = 0x4, scoped, tag = 'scoped memory for tpu_custom_call.1']
    #allocation4 [shape = 's32[1]{0}', space=sflag, size = 0x4, scoped, tag = 'scoped memory for tpu_custom_call.1']
    #allocation5 [shape = 'u8[4096]{0}', space=vmem, size = 0x1000, scoped, tag = 'input window, operand 1, single buffered']
    #allocation6 [shape = 's32[1]{0}', space=sflag, size = 0x4, scoped, tag = 'scoped memory for tpu_custom_call.1']
    #allocation7 [shape = 'u8[4096]{0}', space=vmem, size = 0x1000, scoped, tag = 'output window, operand 0, single buffered']
    %8 = vsyncpa [#allocation3], 0
    %9 = vsyncpa [#allocation6], 0
    %10 = vsyncpa [#allocation4], 0
    // Predicated region
    $region2: #{tpu_custom_call.1} parent=1 // pred_check
      _
    $region3: #{tpu_custom_call.1} parent=1 // pred_check_branch
      %12 = sbr.rel (0) target = $region5
    $region4: #{tpu_custom_call.1} parent=1 // pred_region
      %14 = vsyncadd [#allocation3], 0
      %s16 = sshll.u32 %s0, 4
      %s17 = int_to_ptr.hbm [resolvable:$true] %s16
      %s18 = sshll.u32 [#allocation2], 4
      %s19 = int_to_ptr.vmem [resolvable:$true] %s18
      %21 = dma.hbm_to_vmem [thread:$0]  %s17, 128, %s19, [#allocation3]
    $region5: #{tpu_custom_call.1} parent=1 // pred_fallthru
      _
    // Predicated region
    $region6: #{tpu_custom_call.1} parent=1 // pred_check
      _
    $region7: #{tpu_custom_call.1} parent=1 // pred_check_branch
      %23 = sbr.rel (0) target = $region9
    $region8: #{tpu_custom_call.1} parent=1 // pred_region
      %25 = vsyncadd [#allocation6], 0
      %s27 = sshll.u32 %s1, 4
      %s28 = int_to_ptr.hbm [resolvable:$true] %s27
      %s29 = sshll.u32 [#allocation5], 4
      %s30 = int_to_ptr.vmem [resolvable:$true] %s29
      %32 = dma.hbm_to_vmem [thread:$0]  %s28, 128, %s30, [#allocation6]
    $region9: #{tpu_custom_call.1} parent=1 // pred_fallthru
      _
    // Predicated region
    $region10: #{tpu_custom_call.1} parent=1 // pred_check
      _
    $region11: #{tpu_custom_call.1} parent=1 // pred_check_branch
      %34 = sbr.rel (0) target = $region13
    $region12: #{tpu_custom_call.1} parent=1 // pred_region
      _
    $region13: #{tpu_custom_call.1} parent=1 // pred_fallthru
      _
    // Predicated region
    $region14: #{tpu_custom_call.1} parent=1 // pred_check
      _
    $region15: #{tpu_custom_call.1} parent=1 // pred_check_branch
      %36 = sbr.rel (0) target = $region17
    $region16: #{tpu_custom_call.1} parent=1 // pred_region
      %38 = dma.done [#allocation3], 128
    $region17: #{tpu_custom_call.1} parent=1 // pred_fallthru
      _
    // Predicated region
    $region18: #{tpu_custom_call.1} parent=1 // pred_check
      _
    $region19: #{tpu_custom_call.1} parent=1 // pred_check_branch
      %40 = sbr.rel (0) target = $region21
    $region20: #{tpu_custom_call.1} parent=1 // pred_region
      %42 = dma.done [#allocation6], 128
    $region21: #{tpu_custom_call.1} parent=1 // pred_fallthru
      _
    %v43 = vld [vmem:[#allocation2] sm:$0xff]
    %v44 = vld [vmem:[#allocation5] sm:$0xff]
    %v45 = vld [vmem:[%s2] sm:$0x1]
    %v47 = vperm.slane %v45, 0
    %vm49 = vcmask 64512
    %v51 = vsel %vm49, %v43, 0
    %53 = vmatpush.msra.mxu0 0.0
    %54 = vmatpush.msra.mxu0 0.0
    %55 = vmatpush.msra.mxu0 0.0
    %56 = vmatpush.msra.mxu0 0.0
    %57 = vmatpush.msra.mxu0 0.0
    %58 = vmatpush.msra.mxu0 0.0
    %59 = vmatpush.msra.mxu0 0.0
    %60 = vmatpush.msra.mxu0 0.0
    %61 = vmatpush.msra.mxu0 0.0
    %62 = vmatpush.msra.mxu0 0.0
    %63 = vmatpush.msra.mxu0 0.0
    %64 = vmatpush.msra.mxu0 0.0
    %65 = vmatpush.msra.mxu0 0.0
    %66 = vmatpush.msra.mxu0 0.0
    %67 = vmatpush.msra.mxu0 0.0
    %68 = vmatpush.msra.mxu0 %v44
    %69 = vmatmul.f32.gmra.mxu0 %v51
    %v70 = vpop.f32.mrf.mxu0
    %v71 = vadd.f32 %v47, %v70
    %72 = vdwg.mxu0
    %73 = vst [vmem:[#allocation7] sm:$0xff] %v71
    // Predicated region
    $region22: #{tpu_custom_call.1} parent=1 // pred_check
      _
    $region23: #{tpu_custom_call.1} parent=1 // pred_check_branch
      %75 = sbr.rel (0) target = $region25
    $region24: #{tpu_custom_call.1} parent=1 // pred_region
      %77 = vsyncadd [#allocation4], 0
      %s79 = sshll.u32 [#allocation7], 4
      %s80 = int_to_ptr.vmem [resolvable:$true] %s79
      %s81 = sshll.u32 %s3, 4
      %s82 = int_to_ptr.hbm [resolvable:$true] %s81
      %84 = dma.vmem_to_hbm [thread:$0]  %s80, 128, %s82, [#allocation4]
    $region25: #{tpu_custom_call.1} parent=1 // pred_fallthru
      _
    // Predicated region
    $region26: #{tpu_custom_call.1} parent=1 // pred_check
      _
    $region27: #{tpu_custom_call.1} parent=1 // pred_check_branch
      %86 = sbr.rel (0) target = $region29
    $region28: #{tpu_custom_call.1} parent=1 // pred_region
      %88 = dma.done [#allocation4], 128
    $region29: #{tpu_custom_call.1} parent=1 // pred_fallthru
      _
    %89 = vsyncpa [#allocation3], 1
    %90 = vsyncpa [#allocation6], 1
    %91 = vsyncpa [#allocation4], 1

// kernel: tpu_custom_call.1
$region0: #{tpu_custom_call.1}
  #allocation0 [shape = 'u32[]', space=smem, size = 0x4, offset = 0x4, fixed_abs, tag = 'smem constant byte address 0x4 - core index']
  #allocation1 [shape = 'u32[72,128]{1,0:T(1,128)}', space=vmem, size = 0x9000, scoped, tag = 'internal scratch']
  %s0 = inlined_call_operand.hbm [shape: f32[8,8], index: 0, kind: input, shape index: {}]
  %s1 = inlined_call_operand.hbm [shape: f32[8,128], index: 1, kind: input, shape index: {}]
  %s2 = inlined_call_operand.vmem [shape: f32[1,128], index: 2, kind: input, shape index: {}]
  %s3 = inlined_call_operand.hbm [shape: f32[8,128], index: 3, kind: output, shape index: {}]
  %s4 = sld [smem:[#allocation0]]
  $region30: #{tpu_custom_call.1} parent=0
    _
  %s6 = ssub.s32 1, %s4
  %s7 = scalar_select 0, %s6, %s4
  $region1: #{tpu_custom_call.1} parent=0
    #allocation2 [shape = 'u8[4096]{0}', space=vmem, size = 0x1000, scoped, tag = 'input window, operand 0, single buffered']
    #allocation3 [shape = 's32[1]{0}', space=sflag, size = 0x4, scoped, tag = 'scoped memory for tpu_custom_call.1']
    #allocation4 [shape = 's32[1]{0}', space=sflag, size = 0x4, scoped, tag = 'scoped memory for tpu_custom_call.1']
    #allocation5 [shape = 'u8[4096]{0}', space=vmem, size = 0x1000, scoped, tag = 'input window, operand 1, single buffered']
    #allocation6 [shape = 's32[1]{0}', space=sflag, size = 0x4, scoped, tag = 'scoped memory for tpu_custom_call.1']
    #allocation7 [shape = 'u8[4096]{0}', space=vmem, size = 0x1000, scoped, tag = 'output window, operand 0, single buffered']
    %8 = vsyncpa [#allocation3], 0
    %9 = vsyncpa [#allocation6], 0
    %10 = vsyncpa [#allocation4], 0
    // Predicated region
    $region2: #{tpu_custom_call.1} parent=1 // pred_check
      _
    $region3: #{tpu_custom_call.1} parent=1 // pred_check_branch
      %12 = sbr.rel (0) target = $region5
    $region4: #{tpu_custom_call.1} parent=1 // pred_region
      %14 = vsyncadd [#allocation3], 0
      %s16 = sshll.u32 %s0, 4
      %s17 = int_to_ptr.hbm [resolvable:$true] %s16
      %s18 = sshll.u32 [#allocation2], 4
      %s19 = int_to_ptr.vmem [resolvable:$true] %s18
      %21 = dma.hbm_to_vmem [thread:$0]  %s17, 128, %s19, [#allocation3]
    $region5: #{tpu_custom_call.1} parent=1 // pred_fallthru
      _
    // Predicated region
    $region6: #{tpu_custom_call.1} parent=1 // pred_check
      _
    $region7: #{tpu_custom_call.1} parent=1 // pred_check_branch
      %23 = sbr.rel (0) target = $region9
    $region8: #{tpu_custom_call.1} parent=1 // pred_region
      %25 = vsyncadd [#allocation6], 0
      %s27 = sshll.u32 %s1, 4
      %s28 = int_to_ptr.hbm [resolvable:$true] %s27
      %s29 = sshll.u32 [#allocation5], 4
      %s30 = int_to_ptr.vmem [resolvable:$true] %s29
      %32 = dma.hbm_to_vmem [thread:$0]  %s28, 128, %s30, [#allocation6]
    $region9: #{tpu_custom_call.1} parent=1 // pred_fallthru
      _
    // Predicated region
    $region10: #{tpu_custom_call.1} parent=1 // pred_check
      _
    $region11: #{tpu_custom_call.1} parent=1 // pred_check_branch
      %34 = sbr.rel (0) target = $region13
    $region12: #{tpu_custom_call.1} parent=1 // pred_region
      _
    $region13: #{tpu_custom_call.1} parent=1 // pred_fallthru
      _
    // Predicated region
    $region14: #{tpu_custom_call.1} parent=1 // pred_check
      _
    $region15: #{tpu_custom_call.1} parent=1 // pred_check_branch
      %36 = sbr.rel (0) target = $region17
    $region16: #{tpu_custom_call.1} parent=1 // pred_region
      %38 = dma.done [#allocation3], 128
    $region17: #{tpu_custom_call.1} parent=1 // pred_fallthru
      _
    // Predicated region
    $region18: #{tpu_custom_call.1} parent=1 // pred_check
      _
    $region19: #{tpu_custom_call.1} parent=1 // pred_check_branch
      %40 = sbr.rel (0) target = $region21
    $region20: #{tpu_custom_call.1} parent=1 // pred_region
      %42 = dma.done [#allocation6], 128
    $region21: #{tpu_custom_call.1} parent=1 // pred_fallthru
      _
    %v43 = vld [vmem:[#allocation2] sm:$0xff]
    %v44 = vld [vmem:[#allocation5] sm:$0xff]
    %v45 = vld [vmem:[%s2] sm:$0x1]
    %v47 = vperm.slane %v45, 0
    %vm49 = vcmask 64512
    %v51 = vsel %vm49, %v43, 0
    %53 = vmatpush.msra.mxu0 0.0
    %54 = vmatpush.msra.mxu0 0.0
    %55 = vmatpush.msra.mxu0 0.0
    %56 = vmatpush.msra.mxu0 0.0
    %57 = vmatpush.msra.mxu0 0.0
    %58 = vmatpush.msra.mxu0 0.0
    %59 = vmatpush.msra.mxu0 0.0
    %60 = vmatpush.msra.mxu0 0.0
    %61 = vmatpush.msra.mxu0 0.0
    %62 = vmatpush.msra.mxu0 0.0
    %63 = vmatpush.msra.mxu0 0.0
    %64 = vmatpush.msra.mxu0 0.0
    %65 = vmatpush.msra.mxu0 0.0
    %66 = vmatpush.msra.mxu0 0.0
    %67 = vmatpush.msra.mxu0 0.0
    %68 = vmatpush.msra.mxu0 %v44
    %69 = vmatmul.f32.gmra.mxu0 %v51
    %v70 = vpop.f32.mrf.mxu0
    %v71 = vadd.f32 %v47, %v70
    %72 = vdwg.mxu0
    %73 = vst [vmem:[#allocation7] sm:$0xff] %v71
    // Predicated region
    $region22: #{tpu_custom_call.1} parent=1 // pred_check
      _
    $region23: #{tpu_custom_call.1} parent=1 // pred_check_branch
      %75 = sbr.rel (0) target = $region25
    $region24: #{tpu_custom_call.1} parent=1 // pred_region
      %77 = vsyncadd [#allocation4], 0
      %s79 = sshll.u32 [#allocation7], 4
      %s80 = int_to_ptr.vmem [resolvable:$true] %s79
      %s81 = sshll.u32 %s3, 4
      %s82 = int_to_ptr.hbm [resolvable:$true] %s81
      %84 = dma.vmem_to_hbm [thread:$0]  %s80, 128, %s82, [#allocation4]
    $region25: #{tpu_custom_call.1} parent=1 // pred_fallthru
      _
    // Predicated region
    $region26: #{tpu_custom_call.1} parent=1 // pred_check
      _
    $region27: #{tpu_custom_call.1} parent=1 // pred_check_branch
      %86 = sbr.rel (0) target = $region29
    $region28: #{tpu_custom_call.1} parent=1 // pred_region
      %88 = dma.done [#allocation4], 128
    $region29: #{tpu_custom_call.1} parent=1 // pred_fallthru
      _
    %89 = vsyncpa [#allocation3], 1
    %90 = vsyncpa [#allocation6], 1
    %91 = vsyncpa [#allocation4], 1

</llo_original>
